<compile_context>
chip_gen: v7x
topology: tpu7x:2x2x1
jax: 0.10.0
libtpu: 0.0.40
codegen_flags: <defaults>
</compile_context>

<pallas_src>
import jax
import jax.numpy as jnp
from jax.experimental import pallas as pl
from jax.experimental.pallas import tpu as pltpu


def _attnmap_kernel(x_ref, w1_ref, b1_ref, w2_ref, b2_ref, o_ref):
    # x_ref / o_ref: (C, TS) tile, spatial on the lane axis.
    x = x_ref[...].astype(jnp.float32)        # (C, TS)
    w1 = w1_ref[...].astype(jnp.float32)      # (C, C)  conv layout (Cout, Cin)
    w2 = w2_ref[...].astype(jnp.float32)      # (C, C)
    b1 = b1_ref[...].astype(jnp.float32)      # (C, 1)
    b2 = b2_ref[...].astype(jnp.float32)      # (C, 1)

    C = x.shape[0]

    if C <= 32:
        # Tiny channel count: unrolled broadcast-multiply-add on the VPU.
        # h[o, :] = sum_i w1[o, i] * x[i, :] + b1[o]
        h = w1[:, 0:1] * x[0:1, :] + b1
        for i in range(1, C):
            h = h + w1[:, i:i + 1] * x[i:i + 1, :]
    else:
        h = jnp.dot(w1, x, preferred_element_type=jnp.float32) + b1

    # MemoryEfficientSwish forward: h * sigmoid(h).  exp goes to the EUP.
    h = h * pl.reciprocal(1.0 + jnp.exp(-h), approx=False)

    if C <= 32:
        y = w2[:, 0:1] * h[0:1, :] + b2
        for i in range(1, C):
            y = y + w2[:, i:i + 1] * h[i:i + 1, :]
    else:
        y = jnp.dot(w2, h, preferred_element_type=jnp.float32) + b2

    o_ref[...] = y.astype(o_ref.dtype)


def attn_map(x_nchw, w1, b1, w2, b2, *, max_ts=4096):
    """AttnMap forward.

    x_nchw: (B, C, H, W)
    w1, w2: (Cout, Cin) (1x1 conv weights with kernel dims squeezed)
    b1, b2: (C,)
    """
    B, C, H, W = x_nchw.shape
    S = H * W
    x3 = x_nchw.reshape(B, C, S)          # zero-copy: spatial becomes lane axis

    # Lane-tile size: large (amortizes per-grid-step overhead), multiple of 128
    # so blocks are lane-aligned; if S is not 128-aligned fall back to the full
    # spatial extent (full-extent blocks are always legal).
    if S % 128 == 0:
        ts = min(S, max_ts)
    else:
        ts = S
    grid_s = pl.cdiv(S, ts)

    b1c = b1.reshape(C, 1)
    b2c = b2.reshape(C, 1)

    n_elems = B * C * S
    itemsize = x_nchw.dtype.itemsize
    cost = pl.CostEstimate(
        flops=4 * n_elems * C,                       # two CxC contractions
        transcendentals=n_elems,                     # one exp per element
        bytes_accessed=2 * n_elems * itemsize + 2 * C * C * 4 + 2 * C * 4,
    )

    out3 = pl.pallas_call(
        _attnmap_kernel,
        out_shape=jax.ShapeDtypeStruct((B, C, S), x_nchw.dtype),
        grid_spec=pltpu.PrefetchScalarGridSpec(
            num_scalar_prefetch=0,
            grid=(B, grid_s),
            in_specs=[
                pl.BlockSpec((None, C, ts), lambda b, s: (b, 0, s)),  # x tile
                pl.BlockSpec((C, C), lambda b, s: (0, 0)),            # W1 (resident)
                pl.BlockSpec((C, 1), lambda b, s: (0, 0)),            # b1
                pl.BlockSpec((C, C), lambda b, s: (0, 0)),            # W2 (resident)
                pl.BlockSpec((C, 1), lambda b, s: (0, 0)),            # b2
            ],
            out_specs=pl.BlockSpec((None, C, ts), lambda b, s: (b, 0, s)),
        ),
        compiler_params=pltpu.CompilerParams(
            dimension_semantics=("parallel", "parallel"),
            vmem_limit_bytes=32 * 1024 * 1024,   # small tiles; safe on v7x's 64 MiB
        ),
        cost_estimate=cost,
    )(x3, w1, b1c, w2, b2c)

    return out3.reshape(B, C, H, W)


def attn_map_ref(x_nchw, w1, b1, w2, b2):
    # Pure-JAX reference (1x1 convs as einsum over channels).
    h = jnp.einsum("bchw,oc->bohw", x_nchw, w1) + b1[None, :, None, None]
    h = h * jax.nn.sigmoid(h)
    y = jnp.einsum("bchw,oc->bohw", h, w2) + b2[None, :, None, None]
    return y


if __name__ == "__main__":
    B, C, H, W = 2, 4, 16, 16  # dim = 4
    key = jax.random.PRNGKey(0)
    kx, k1, k2, k3, k4 = jax.random.split(key, 5)

    x = jax.random.normal(kx, (B, C, H, W), dtype=jnp.float32)
    # Conv2d(dim, dim, 1) weights: (Cout, Cin, 1, 1) -> squeezed to (Cout, Cin)
    w1 = jax.random.normal(k1, (C, C), dtype=jnp.float32) * 0.1
    b1 = jax.random.normal(k2, (C,), dtype=jnp.float32) * 0.1
    w2 = jax.random.normal(k3, (C, C), dtype=jnp.float32) * 0.1
    b2 = jax.random.normal(k4, (C,), dtype=jnp.float32) * 0.1

    out = attn_map(x, w1, b1, w2, b2)
    out = jax.block_until_ready(out)

    ref = attn_map_ref(x, w1, b1, w2, b2)
    assert out.shape == (B, C, H, W)
    max_err = float(jnp.max(jnp.abs(out - ref)))
    assert jnp.allclose(out, ref, atol=1e-4, rtol=1e-4), max_err
    print("KERNEL_OK")
</pallas_src>

<mosaic_0001>
module attributes {stable_mosaic.version = 11 : i64} {
  func.func @_attnmap_kernel(%arg0: i32, %arg1: i32, %arg2: memref<1x4x256xf32, #tpu.memory_space<vmem>>, %arg3: memref<4x4xf32, #tpu.memory_space<vmem>>, %arg4: memref<4x1xf32, #tpu.memory_space<vmem>>, %arg5: memref<4x4xf32, #tpu.memory_space<vmem>>, %arg6: memref<4x1xf32, #tpu.memory_space<vmem>>, %arg7: memref<1x4x256xf32, #tpu.memory_space<vmem>>) attributes {dimension_semantics = [#tpu.dimension_semantics<parallel>, #tpu.dimension_semantics<parallel>], iteration_bounds = array<i64: 2, 1>, scalar_prefetch = 0 : i64, scratch_operands = 0 : i64, tpu.core_type = #tpu.core_type<tc>, window_params = [{transform_indices = @transform_0, window_bounds = array<i64: 1, 4, 256>}, {pipeline_mode = #tpu.pipeline_mode<synchronous>, transform_indices = @transform_1, window_bounds = array<i64: 4, 4>}, {pipeline_mode = #tpu.pipeline_mode<synchronous>, transform_indices = @transform_2, window_bounds = array<i64: 4, 1>}, {pipeline_mode = #tpu.pipeline_mode<synchronous>, transform_indices = @transform_3, window_bounds = array<i64: 4, 4>}, {pipeline_mode = #tpu.pipeline_mode<synchronous>, transform_indices = @transform_4, window_bounds = array<i64: 4, 1>}, {transform_indices = @transform_5, window_bounds = array<i64: 1, 4, 256>}]} {
    %c0 = arith.constant 0 : index
    %c0_0 = arith.constant 0 : index
    %c0_1 = arith.constant 0 : index
    %0 = vector.load %arg2[%c0, %c0_0, %c0_1] : memref<1x4x256xf32, #tpu.memory_space<vmem>>, vector<1x4x256xf32>
    %1 = vector.shape_cast %0 : vector<1x4x256xf32> to vector<4x256xf32>
    %c0_2 = arith.constant 0 : index
    %c0_3 = arith.constant 0 : index
    %2 = vector.load %arg3[%c0_2, %c0_3] : memref<4x4xf32, #tpu.memory_space<vmem>>, vector<4x4xf32>
    %c0_4 = arith.constant 0 : index
    %c0_5 = arith.constant 0 : index
    %3 = vector.load %arg5[%c0_4, %c0_5] : memref<4x4xf32, #tpu.memory_space<vmem>>, vector<4x4xf32>
    %c0_6 = arith.constant 0 : index
    %c0_7 = arith.constant 0 : index
    %4 = vector.load %arg4[%c0_6, %c0_7] : memref<4x1xf32, #tpu.memory_space<vmem>>, vector<4x1xf32>
    %c0_8 = arith.constant 0 : index
    %c0_9 = arith.constant 0 : index
    %5 = vector.load %arg6[%c0_8, %c0_9] : memref<4x1xf32, #tpu.memory_space<vmem>>, vector<4x1xf32>
    %6 = vector.extract_strided_slice %2 {offsets = [0, 0], sizes = [4, 1], strides = [1, 1]} : vector<4x4xf32> to vector<4x1xf32>
    %7 = vector.extract_strided_slice %1 {offsets = [0, 0], sizes = [1, 256], strides = [1, 1]} : vector<4x256xf32> to vector<1x256xf32>
    %8 = vector.broadcast %6 : vector<4x1xf32> to vector<4x256xf32>
    %9 = vector.broadcast %7 : vector<1x256xf32> to vector<4x256xf32>
    %10 = arith.mulf %8, %9 : vector<4x256xf32>
    %11 = vector.broadcast %4 : vector<4x1xf32> to vector<4x256xf32>
    %12 = arith.addf %10, %11 : vector<4x256xf32>
    %13 = vector.extract_strided_slice %2 {offsets = [0, 1], sizes = [4, 1], strides = [1, 1]} : vector<4x4xf32> to vector<4x1xf32>
    %14 = vector.extract_strided_slice %1 {offsets = [1, 0], sizes = [1, 256], strides = [1, 1]} : vector<4x256xf32> to vector<1x256xf32>
    %15 = vector.broadcast %13 : vector<4x1xf32> to vector<4x256xf32>
    %16 = vector.broadcast %14 : vector<1x256xf32> to vector<4x256xf32>
    %17 = arith.mulf %15, %16 : vector<4x256xf32>
    %18 = arith.addf %12, %17 : vector<4x256xf32>
    %19 = vector.extract_strided_slice %2 {offsets = [0, 2], sizes = [4, 1], strides = [1, 1]} : vector<4x4xf32> to vector<4x1xf32>
    %20 = vector.extract_strided_slice %1 {offsets = [2, 0], sizes = [1, 256], strides = [1, 1]} : vector<4x256xf32> to vector<1x256xf32>
    %21 = vector.broadcast %19 : vector<4x1xf32> to vector<4x256xf32>
    %22 = vector.broadcast %20 : vector<1x256xf32> to vector<4x256xf32>
    %23 = arith.mulf %21, %22 : vector<4x256xf32>
    %24 = arith.addf %18, %23 : vector<4x256xf32>
    %25 = vector.extract_strided_slice %2 {offsets = [0, 3], sizes = [4, 1], strides = [1, 1]} : vector<4x4xf32> to vector<4x1xf32>
    %26 = vector.extract_strided_slice %1 {offsets = [3, 0], sizes = [1, 256], strides = [1, 1]} : vector<4x256xf32> to vector<1x256xf32>
    %27 = vector.broadcast %25 : vector<4x1xf32> to vector<4x256xf32>
    %28 = vector.broadcast %26 : vector<1x256xf32> to vector<4x256xf32>
    %29 = arith.mulf %27, %28 : vector<4x256xf32>
    %30 = arith.addf %24, %29 : vector<4x256xf32>
    %cst = arith.constant 0.000000e+00 : f32
    %31 = vector.broadcast %cst : f32 to vector<4x256xf32>
    %32 = arith.subf %31, %30 : vector<4x256xf32>
    %33 = math.exp %32 : vector<4x256xf32>
    %cst_10 = arith.constant 1.000000e+00 : f32
    %34 = vector.broadcast %cst_10 : f32 to vector<4x256xf32>
    %35 = arith.addf %34, %33 : vector<4x256xf32>
    %36 = tpu.reciprocal %35 : vector<4x256xf32> -> vector<4x256xf32>
    %37 = arith.mulf %30, %36 : vector<4x256xf32>
    %38 = vector.extract_strided_slice %3 {offsets = [0, 0], sizes = [4, 1], strides = [1, 1]} : vector<4x4xf32> to vector<4x1xf32>
    %39 = vector.extract_strided_slice %37 {offsets = [0, 0], sizes = [1, 256], strides = [1, 1]} : vector<4x256xf32> to vector<1x256xf32>
    %40 = vector.broadcast %38 : vector<4x1xf32> to vector<4x256xf32>
    %41 = vector.broadcast %39 : vector<1x256xf32> to vector<4x256xf32>
    %42 = arith.mulf %40, %41 : vector<4x256xf32>
    %43 = vector.broadcast %5 : vector<4x1xf32> to vector<4x256xf32>
    %44 = arith.addf %42, %43 : vector<4x256xf32>
    %45 = vector.extract_strided_slice %3 {offsets = [0, 1], sizes = [4, 1], strides = [1, 1]} : vector<4x4xf32> to vector<4x1xf32>
    %46 = vector.extract_strided_slice %37 {offsets = [1, 0], sizes = [1, 256], strides = [1, 1]} : vector<4x256xf32> to vector<1x256xf32>
    %47 = vector.broadcast %45 : vector<4x1xf32> to vector<4x256xf32>
    %48 = vector.broadcast %46 : vector<1x256xf32> to vector<4x256xf32>
    %49 = arith.mulf %47, %48 : vector<4x256xf32>
    %50 = arith.addf %44, %49 : vector<4x256xf32>
    %51 = vector.extract_strided_slice %3 {offsets = [0, 2], sizes = [4, 1], strides = [1, 1]} : vector<4x4xf32> to vector<4x1xf32>
    %52 = vector.extract_strided_slice %37 {offsets = [2, 0], sizes = [1, 256], strides = [1, 1]} : vector<4x256xf32> to vector<1x256xf32>
    %53 = vector.broadcast %51 : vector<4x1xf32> to vector<4x256xf32>
    %54 = vector.broadcast %52 : vector<1x256xf32> to vector<4x256xf32>
    %55 = arith.mulf %53, %54 : vector<4x256xf32>
    %56 = arith.addf %50, %55 : vector<4x256xf32>
    %57 = vector.extract_strided_slice %3 {offsets = [0, 3], sizes = [4, 1], strides = [1, 1]} : vector<4x4xf32> to vector<4x1xf32>
    %58 = vector.extract_strided_slice %37 {offsets = [3, 0], sizes = [1, 256], strides = [1, 1]} : vector<4x256xf32> to vector<1x256xf32>
    %59 = vector.broadcast %57 : vector<4x1xf32> to vector<4x256xf32>
    %60 = vector.broadcast %58 : vector<1x256xf32> to vector<4x256xf32>
    %61 = arith.mulf %59, %60 : vector<4x256xf32>
    %62 = arith.addf %56, %61 : vector<4x256xf32>
    %c0_11 = arith.constant 0 : index
    %c0_12 = arith.constant 0 : index
    %c0_13 = arith.constant 0 : index
    %63 = vector.load %arg7[%c0_11, %c0_12, %c0_13] : memref<1x4x256xf32, #tpu.memory_space<vmem>>, vector<1x4x256xf32>
    %64 = vector.shape_cast %63 : vector<1x4x256xf32> to vector<4x256xf32>
    %65 = vector.shape_cast %62 : vector<4x256xf32> to vector<1x4x256xf32>
    tpu.vector_store %arg7[%c0_11, %c0_12, %c0_13], %65 {strides = array<i32>} : memref<1x4x256xf32, #tpu.memory_space<vmem>>, vector<1x4x256xf32>,
    return
  }
  func.func @transform_0(%arg0: i32, %arg1: i32) -> (i32, i32, i32) {
    %c0_i32 = arith.constant 0 : i32
    %c0_i32_0 = arith.constant 0 : i32
    return %arg0, %c0_i32, %arg1 : i32, i32, i32
  }
  func.func @transform_1(%arg0: i32, %arg1: i32) -> (i32, i32) {
    %c0_i32 = arith.constant 0 : i32
    %c0_i32_0 = arith.constant 0 : i32
    %c0_i32_1 = arith.constant 0 : i32
    return %c0_i32, %c0_i32_0 : i32, i32
  }
  func.func @transform_2(%arg0: i32, %arg1: i32) -> (i32, i32) {
    %c0_i32 = arith.constant 0 : i32
    %c0_i32_0 = arith.constant 0 : i32
    %c0_i32_1 = arith.constant 0 : i32
    return %c0_i32, %c0_i32_0 : i32, i32
  }
  func.func @transform_3(%arg0: i32, %arg1: i32) -> (i32, i32) {
    %c0_i32 = arith.constant 0 : i32
    %c0_i32_0 = arith.constant 0 : i32
    %c0_i32_1 = arith.constant 0 : i32
    return %c0_i32, %c0_i32_0 : i32, i32
  }
  func.func @transform_4(%arg0: i32, %arg1: i32) -> (i32, i32) {
    %c0_i32 = arith.constant 0 : i32
    %c0_i32_0 = arith.constant 0 : i32
    %c0_i32_1 = arith.constant 0 : i32
    return %c0_i32, %c0_i32_0 : i32, i32
  }
  func.func @transform_5(%arg0: i32, %arg1: i32) -> (i32, i32, i32) {
    %c0_i32 = arith.constant 0 : i32
    %c0_i32_0 = arith.constant 0 : i32
    return %arg0, %c0_i32, %arg1 : i32, i32, i32
  }
}

</mosaic_0001>

<llo_original>
// kernel: tpu_custom_call.1
$region0: #{tpu_custom_call.1}
  #allocation0 [shape = 'u32[]', space=smem, size = 0x4, offset = 0x4, fixed_abs, tag = 'smem constant byte address 0x4 - core index']
  #allocation1 [shape = 'u32[144,128]{1,0:T(1,128)}', space=vmem, size = 0x12000, scoped, tag = 'internal scratch']
  %s0 = inlined_call_operand.hbm [shape: f32[2,4,256], index: 0, kind: input, shape index: {}]
  %s1 = inlined_call_operand.vmem [shape: f32[4,4], index: 1, kind: input, shape index: {}]
  %s2 = inlined_call_operand.vmem [shape: f32[4,1], index: 2, kind: input, shape index: {}]
  %s3 = inlined_call_operand.vmem [shape: f32[4,4], index: 3, kind: input, shape index: {}]
  %s4 = inlined_call_operand.vmem [shape: f32[4,1], index: 4, kind: input, shape index: {}]
  %s5 = inlined_call_operand.hbm [shape: f32[2,4,256], index: 5, kind: output, shape index: {}]
  %s6 = sld [smem:[#allocation0]]
  $region57: #{tpu_custom_call.1} parent=0
    _
  %s8 = ssub.s32 1, %s6
  %s9 = scalar_select 0, %s8, %s6
  $region1: #{tpu_custom_call.1} parent=0
    #allocation2 [shape = 'u8[8192]{0}', space=vmem, size = 0x2000, scoped, tag = 'input window, operand 0']
    #allocation3 [shape = 's32[2]{0}', space=sflag, size = 0x8, scoped, tag = 'scoped memory for tpu_custom_call.1']
    #allocation4 [shape = 's32[2]{0}', space=sflag, size = 0x8, scoped, tag = 'scoped memory for tpu_custom_call.1']
    #allocation5 [shape = 'u8[8192]{0}', space=vmem, size = 0x2000, scoped, tag = 'output window, operand 0']
    %10 = vsyncpa [#allocation3], 0
    %s11 = scalar_lea.sflag [#allocation3], 1
    %12 = vsyncpa %s11, 0
    %13 = vsyncpa [#allocation4], 0
    %s14 = scalar_lea.sflag [#allocation4], 1
    %15 = vsyncpa %s14, 0
    loop: start=0, step=1, limit=4
    $region2: #{tpu_custom_call.1} parent=1 // loop_pre_header
      _
    $region3: #{tpu_custom_call.1} parent=1 // loop_header
      %s17 = sphi 0, %s21
      %p18 = scmp.ge.s32.totalorder %s17, 4
      %s24 = sphi 0, %s36
      %s25 = sphi 0, %s32
      %s26 = sphi 0, %s24
      %s27 = sphi 0, %s25
      %s28 = sphi 0, %s26
      %s29 = sphi 0, %s27
      %s41 = sphi 0, %s43
      %s44 = sphi 0, %s41
      %s45 = sphi 0, %s44
      %s61 = sphi 0, %s45
      %s65 = sphi 0, %s65
      %s67 = sphi 0, %s65
      %s68 = sphi 0, %s67
      %s82 = sphi 0, %s68
      %s86 = sphi 0, %s86
      %s88 = sphi 0, %s86
      %s89 = sphi 0, %s88
      %s103 = sphi 0, %s89
      %s107 = sphi 0, %s107
      %s109 = sphi 0, %s107
      %s110 = sphi 0, %s109
      %s124 = sphi 0, %s110
      %s128 = sphi 0, %s128
      %s130 = sphi 0, %s128
      %s131 = sphi 0, %s130
      %s145 = sphi 0, %s131
      %s153 = sphi 0, %s155
      %s156 = sphi 0, %s153
      %s157 = sphi 0, %s156
      %s173 = sphi 0, %s157
    $region4: #{tpu_custom_call.1} parent=1 // loop_header_branch
      %20 = sbr.rel (%p18) target = $region8
    $region5: #{tpu_custom_call.1} parent=1 // loop_body
      %s22 = ssub.s32 %s17, 1
      %s23 = ssub.s32 %s17, 2
      %s30 = sadd.s32 1, %s25
      %p31 = scmp.ge.s32.totalorder %s30, 1
      %s32 = scalar_select %p31, 0, %s30
      %s33 = sadd.s32 1, %s24
      %s34 = scalar_select %p31, %s33, %s24
      %p35 = scmp.ge.s32.totalorder %s34, 2
      %s36 = scalar_select %p35, 0, %s34
      %s37 = ssub.s32 %s24, %s36
      %s38 = ssub.s32 %s25, %s32
      %s39 = sor.u32 %s37, %s38
      %p40 = scmp.eq.s32.totalorder %s39, 0
      %s42 = sadd.s32 %s41, 1
      %s43 = scalar_select %p40, %s41, %s42
      %p46 = pneg %p40
      %p47 = scmp.eq.s32.totalorder %s17, 1
      %p48 = por %p46, %p47
      %p49 = scmp.ne.s32.totalorder %s41, %s44
      %p50 = scmp.eq.s32.totalorder %s17, 0
      %p51 = por %p49, %p50
      %p52 = scmp.ne.s32.totalorder %s41, %s44
      %p53 = scmp.eq.s32.totalorder %s22, 1
      %p54 = por %p52, %p53
      %p55 = scmp.ne.s32.totalorder %s44, %s45
      %p56 = scmp.eq.s32.totalorder %s22, 0
      %p57 = por %p55, %p56
      %p58 = scmp.ne.s32.totalorder %s44, %s45
      %p59 = scmp.eq.s32.totalorder %s23, 1
      %p60 = por %p58, %p59
      %p62 = scmp.ne.s32.totalorder %s45, %s61
      %p63 = scmp.eq.s32.totalorder %s23, 0
      %p64 = por %p62, %p63
      %s66 = sadd.s32 %s65, 1
      %p69 = scmp.eq.s32.totalorder %s17, 1
      %p70 = scmp.ne.s32.totalorder %s65, %s67
      %p71 = scmp.eq.s32.totalorder %s17, 0
      %p72 = por %p70, %p71
      %p73 = scmp.ne.s32.totalorder %s65, %s67
      %p74 = scmp.eq.s32.totalorder %s22, 1
      %p75 = por %p73, %p74
      %p76 = scmp.ne.s32.totalorder %s67, %s68
      %p77 = scmp.eq.s32.totalorder %s22, 0
      %p78 = por %p76, %p77
      %p79 = scmp.ne.s32.totalorder %s67, %s68
      %p80 = scmp.eq.s32.totalorder %s23, 1
      %p81 = por %p79, %p80
      %p83 = scmp.ne.s32.totalorder %s68, %s82
      %p84 = scmp.eq.s32.totalorder %s23, 0
      %p85 = por %p83, %p84
      %s87 = sadd.s32 %s86, 1
      %p90 = scmp.eq.s32.totalorder %s17, 1
      %p91 = scmp.ne.s32.totalorder %s86, %s88
      %p92 = scmp.eq.s32.totalorder %s17, 0
      %p93 = por %p91, %p92
      %p94 = scmp.ne.s32.totalorder %s86, %s88
      %p95 = scmp.eq.s32.totalorder %s22, 1
      %p96 = por %p94, %p95
      %p97 = scmp.ne.s32.totalorder %s88, %s89
      %p98 = scmp.eq.s32.totalorder %s22, 0
      %p99 = por %p97, %p98
      %p100 = scmp.ne.s32.totalorder %s88, %s89
      %p101 = scmp.eq.s32.totalorder %s23, 1
      %p102 = por %p100, %p101
      %p104 = scmp.ne.s32.totalorder %s89, %s103
      %p105 = scmp.eq.s32.totalorder %s23, 0
      %p106 = por %p104, %p105
      %s108 = sadd.s32 %s107, 1
      %p111 = scmp.eq.s32.totalorder %s17, 1
      %p112 = scmp.ne.s32.totalorder %s107, %s109
      %p113 = scmp.eq.s32.totalorder %s17, 0
      %p114 = por %p112, %p113
      %p115 = scmp.ne.s32.totalorder %s107, %s109
      %p116 = scmp.eq.s32.totalorder %s22, 1
      %p117 = por %p115, %p116
      %p118 = scmp.ne.s32.totalorder %s109, %s110
      %p119 = scmp.eq.s32.totalorder %s22, 0
      %p120 = por %p118, %p119
      %p121 = scmp.ne.s32.totalorder %s109, %s110
      %p122 = scmp.eq.s32.totalorder %s23, 1
      %p123 = por %p121, %p122
      %p125 = scmp.ne.s32.totalorder %s110, %s124
      %p126 = scmp.eq.s32.totalorder %s23, 0
      %p127 = por %p125, %p126
      %s129 = sadd.s32 %s128, 1
      %p132 = scmp.eq.s32.totalorder %s17, 1
      %p133 = scmp.ne.s32.totalorder %s128, %s130
      %p134 = scmp.eq.s32.totalorder %s17, 0
      %p135 = por %p133, %p134
      %p136 = scmp.ne.s32.totalorder %s128, %s130
      %p137 = scmp.eq.s32.totalorder %s22, 1
      %p138 = por %p136, %p137
      %p139 = scmp.ne.s32.totalorder %s130, %s131
      %p140 = scmp.eq.s32.totalorder %s22, 0
      %p141 = por %p139, %p140
      %p142 = scmp.ne.s32.totalorder %s130, %s131
      %p143 = scmp.eq.s32.totalorder %s23, 1
      %p144 = por %p142, %p143
      %p146 = scmp.ne.s32.totalorder %s131, %s145
      %p147 = scmp.eq.s32.totalorder %s23, 0
      %p148 = por %p146, %p147
      %s149 = ssub.s32 %s24, %s36
      %s150 = ssub.s32 %s25, %s32
      %s151 = sor.u32 %s149, %s150
      %p152 = scmp.eq.s32.totalorder %s151, 0
      %s154 = sadd.s32 %s153, 1
      %s155 = scalar_select %p152, %s153, %s154
      %p158 = pneg %p152
      %p159 = scmp.eq.s32.totalorder %s17, 1
      %p160 = por %p158, %p159
      %p161 = scmp.ne.s32.totalorder %s153, %s156
      %p162 = scmp.eq.s32.totalorder %s17, 0
      %p163 = por %p161, %p162
      %p164 = scmp.ne.s32.totalorder %s153, %s156
      %p165 = scmp.eq.s32.totalorder %s22, 1
      %p166 = por %p164, %p165
      %p167 = scmp.ne.s32.totalorder %s156, %s157
      %p168 = scmp.eq.s32.totalorder %s22, 0
      %p169 = por %p167, %p168
      %p170 = scmp.ne.s32.totalorder %s156, %s157
      %p171 = scmp.eq.s32.totalorder %s23, 1
      %p172 = por %p170, %p171
      %p174 = scmp.ne.s32.totalorder %s157, %s173
      %p175 = scmp.eq.s32.totalorder %s23, 0
      %p176 = por %p174, %p175
      %p177 = scmp.le.s32.totalorder 1, %s17
      %p178 = scmp.lt.s32.totalorder %s17, 3
      %p179 = pnand %p177, %p178
      %p180 = pneg %p179
      // Predicated region
      $region9: #{tpu_custom_call.1} parent=5 // pred_check
        _
      $region10: #{tpu_custom_call.1} parent=5 // pred_check_branch
        %182 = sbr.rel (%p179) target = $region12
      $region11: #{tpu_custom_call.1} parent=5 // pred_region
        %s183 = ssub.s32 %s17, 1
        // Predicated region
        $region13: #{tpu_custom_call.1} parent=11 // pred_check
          %p184 = pneg %p78
        $region14: #{tpu_custom_call.1} parent=11 // pred_check_branch
          %186 = sbr.rel (%p184) target = $region16
        $region15: #{tpu_custom_call.1} parent=11 // pred_region
          _
        $region16: #{tpu_custom_call.1} parent=11 // pred_fallthru
          _
        // Predicated region
        $region17: #{tpu_custom_call.1} parent=11 // pred_check
          %p187 = pneg %p99
        $region18: #{tpu_custom_call.1} parent=11 // pred_check_branch
          %189 = sbr.rel (%p187) target = $region20
        $region19: #{tpu_custom_call.1} parent=11 // pred_region
          _
        $region20: #{tpu_custom_call.1} parent=11 // pred_fallthru
          _
        // Predicated region
        $region21: #{tpu_custom_call.1} parent=11 // pred_check
          %p190 = pneg %p120
        $region22: #{tpu_custom_call.1} parent=11 // pred_check_branch
          %192 = sbr.rel (%p190) target = $region24
        $region23: #{tpu_custom_call.1} parent=11 // pred_region
          _
        $region24: #{tpu_custom_call.1} parent=11 // pred_fallthru
          _
        // Predicated region
        $region25: #{tpu_custom_call.1} parent=11 // pred_check
          %p193 = pneg %p141
        $region26: #{tpu_custom_call.1} parent=11 // pred_check_branch
          %195 = sbr.rel (%p193) target = $region28
        $region27: #{tpu_custom_call.1} parent=11 // pred_region
          _
        $region28: #{tpu_custom_call.1} parent=11 // pred_fallthru
          _
      $region12: #{tpu_custom_call.1} parent=5 // pred_fallthru
        _
      %p196 = scmp.lt.s32.totalorder %s17, 2
      // Predicated region
      $region29: #{tpu_custom_call.1} parent=5 // pred_check
        %p197 = pneg %p196
      $region30: #{tpu_custom_call.1} parent=5 // pred_check_branch
        %199 = sbr.rel (%p197) target = $region32
      $region31: #{tpu_custom_call.1} parent=5 // pred_region
        // Predicated region
        $region33: #{tpu_custom_call.1} parent=31 // pred_check
          %p200 = pneg %p51
        $region34: #{tpu_custom_call.1} parent=31 // pred_check_branch
          %202 = sbr.rel (%p200) target = $region36
        $region35: #{tpu_custom_call.1} parent=31 // pred_region
          %s203 = sand.u32 %s41, 1
          %s204 = scalar_lea.sflag [#allocation3], %s203
          %s205 = sand.u32 %s41, 1
          %s206 = smul.addr %s205, 8
          %s207 = scalar_lea.vmem [#allocation2], %s206
          %s208 = smul.u32 2, %s25
          %s210 = ssub.s32 128, 128
          %211 = vsyncadd %s204, %s210
          %s212 = smul.addr %s24, 2
          %s213 = sadd.s32 %s208, %s212
          %s214 = smul.addr %s213, 64
          %s215 = scalar_lea.hbm %s0, %s214
          %s217 = sshll.u32 %s207, 4
          %s218 = int_to_ptr.vmem [resolvable:$true] %s217
          %220 = dma.hbm_to_vmem [thread:$0]  %s215, 128, %s218, %s204
        $region36: #{tpu_custom_call.1} parent=31 // pred_fallthru
          _
      $region32: #{tpu_custom_call.1} parent=5 // pred_fallthru
        _
      %p221 = scmp.le.s32.totalorder 1, %s17
      %p222 = scmp.lt.s32.totalorder %s17, 3
      %p223 = pnand %p221, %p222
      %p224 = pneg %p223
      // Predicated region
      $region37: #{tpu_custom_call.1} parent=5 // pred_check
        _
      $region38: #{tpu_custom_call.1} parent=5 // pred_check_branch
        %226 = sbr.rel (%p223) target = $region40
      $region39: #{tpu_custom_call.1} parent=5 // pred_region
        %s227 = ssub.s32 %s17, 1
        %s228 = sand.u32 %s44, 1
        %s229 = scalar_lea.sflag [#allocation3], %s228
        %s230 = sand.u32 %s44, 1
        %s231 = smul.addr %s230, 8
        %s232 = scalar_lea.vmem [#allocation2], %s231
        // Predicated region
        $region41: #{tpu_custom_call.1} parent=39 // pred_check
          %p233 = pneg %p57
        $region42: #{tpu_custom_call.1} parent=39 // pred_check_branch
          %235 = sbr.rel (%p233) target = $region44
        $region43: #{tpu_custom_call.1} parent=39 // pred_region
          %236 = dma.done %s229, 128
        $region44: #{tpu_custom_call.1} parent=39 // pred_fallthru
          _
        %s237 = sand.u32 %s44, 1
        %s238 = scalar_lea.sflag [#allocation3], %s237
        %s239 = sand.u32 %s44, 1
        %s240 = smul.addr %s239, 8
        %s241 = scalar_lea.vmem [#allocation2], %s240
        %p242 = pneg %p57
        %p243 = pneg %p54
        %p244 = pneg %p78
        %p245 = pneg %p75
        %p246 = pneg %p99
        %p247 = pneg %p96
        %p248 = pneg %p120
        %p249 = pneg %p117
        %p250 = pneg %p141
        %p251 = pneg %p138
        %p252 = pneg %p169
        %p253 = pneg %p166
        %s254 = sand.u32 %s156, 1
        %s255 = scalar_lea.sflag [#allocation4], %s254
        %s256 = sand.u32 %s156, 1
        %s257 = smul.addr %s256, 8
        %s258 = scalar_lea.vmem [#allocation5], %s257
        %s259 = smul.u32 2, %s27
        %s260 = smul.u32 2, %s27
        %v261 = vld [vmem:[%s232] sm:$0xff]
        %v262 = vld [vmem:[%s1] sm:$0xf]
        %v263 = vld [vmem:[%s3] sm:$0xf]
        %v264 = vld [vmem:[%s2] sm:$0xf]
        %v265 = vld [vmem:[%s4] sm:$0xf]
        %267 = vset.pattern.permute.xlu0 0
        %268 = vperm.xlu0 %267, %v262
        %v269 = vpop.permute.xlu0 %268
        %v272 = vlaneseq
        %v273 = vshrl.u32 %v272, 7
        %v274 = vsub.s32 0, %v273
        %v275 = vrot.slane %v261, %v274
        %v276 = vlaneseq
        %v277 = vshrl.u32 %v276, 7
        %v278 = vsub.s32 4, %v277
        %v279 = vrot.slane %v261, %v278
        %v282 = vlaneseq
        %v283 = vshrl.u32 %v282, 7
        %v284 = vsub.s32 0, %v283
        %v285 = vrot.slane %v275, %v284
        %v286 = vlaneseq
        %v287 = vshrl.u32 %v286, 7
        %v288 = vsub.s32 0, %v287
        %v289 = vrot.slane %v279, %v288
        %v290 = vmul.f32 %v269, %v285
        %v291 = vmul.f32 %v269, %v289
        %293 = vset.pattern.permute.xlu0 0
        %294 = vperm.xlu0 %293, %v264
        %v295 = vpop.permute.xlu0 %294
        %v297 = vadd.f32 %v290, %v295
        %v298 = vadd.f32 %v291, %v295
        %299 = vset.pattern.permute.xlu0 1
        %300 = vperm.xlu0 %299, %v262
        %v301 = vpop.permute.xlu0 %300
        %v303 = vlaneseq
        %v304 = vshrl.u32 %v303, 7
        %v305 = vsub.s32 1, %v304
        %v306 = vrot.slane %v261, %v305
        %v307 = vlaneseq
        %v308 = vshrl.u32 %v307, 7
        %v309 = vsub.s32 5, %v308
        %v310 = vrot.slane %v261, %v309
        %v313 = vlaneseq
        %v314 = vshrl.u32 %v313, 7
        %v315 = vsub.s32 1, %v314
        %v316 = vrot.slane %v306, %v315
        %v317 = vlaneseq
        %v318 = vshrl.u32 %v317, 7
        %v319 = vsub.s32 1, %v318
        %v320 = vrot.slane %v310, %v319
        %v321 = vmul.f32 %v301, %v316
        %v322 = vmul.f32 %v301, %v320
        %v323 = vadd.f32 %v297, %v321
        %v324 = vadd.f32 %v298, %v322
        %325 = vset.pattern.permute.xlu0 2
        %326 = vperm.xlu0 %325, %v262
        %v327 = vpop.permute.xlu0 %326
        %v329 = vlaneseq
        %v330 = vshrl.u32 %v329, 7
        %v331 = vsub.s32 2, %v330
        %v332 = vrot.slane %v261, %v331
        %v333 = vlaneseq
        %v334 = vshrl.u32 %v333, 7
        %v335 = vsub.s32 6, %v334
        %v336 = vrot.slane %v261, %v335
        %v339 = vlaneseq
        %v340 = vshrl.u32 %v339, 7
        %v341 = vsub.s32 2, %v340
        %v342 = vrot.slane %v332, %v341
        %v343 = vlaneseq
        %v344 = vshrl.u32 %v343, 7
        %v345 = vsub.s32 2, %v344
        %v346 = vrot.slane %v336, %v345
        %v347 = vmul.f32 %v327, %v342
        %v348 = vmul.f32 %v327, %v346
        %v349 = vadd.f32 %v323, %v347
        %v350 = vadd.f32 %v324, %v348
        %351 = vset.pattern.permute.xlu0 3
        %352 = vperm.xlu0 %351, %v262
        %v353 = vpop.permute.xlu0 %352
        %v355 = vlaneseq
        %v356 = vshrl.u32 %v355, 7
        %v357 = vsub.s32 3, %v356
        %v358 = vrot.slane %v261, %v357
        %v359 = vlaneseq
        %v360 = vshrl.u32 %v359, 7
        %v361 = vsub.s32 7, %v360
        %v362 = vrot.slane %v261, %v361
        %v365 = vlaneseq
        %v366 = vshrl.u32 %v365, 7
        %v367 = vsub.s32 3, %v366
        %v368 = vrot.slane %v358, %v367
        %v369 = vlaneseq
        %v370 = vshrl.u32 %v369, 7
        %v371 = vsub.s32 3, %v370
        %v372 = vrot.slane %v362, %v371
        %v373 = vmul.f32 %v353, %v368
        %v374 = vmul.f32 %v353, %v372
        %v375 = vadd.f32 %v349, %v373
        %v376 = vadd.f32 %v350, %v374
        %v377 = vsub.f32 0.0, %v375
        %v378 = vsub.f32 0.0, %v376
        %v379 = vmul.f32 %v377, 1.442695
        %v380 = vpow.pop %v379
        %v381 = vmul.f32 %v378, 1.442695
        %v382 = vpow.pop %v381
        %v383 = vadd.f32 %v380, 1.0
        %v384 = vadd.f32 %v382, 1.0
        %v385 = vrcp.pop %v383
        %v386 = vrcp.pop %v384
        %v387 = vmul.f32 %v375, %v385
        %v388 = vmul.f32 %v376, %v386
        %390 = vset.pattern.permute.xlu0 0
        %391 = vperm.xlu0 %390, %v263
        %v392 = vpop.permute.xlu0 %391
        %v394 = vlaneseq
        %v395 = vshrl.u32 %v394, 7
        %v396 = vsub.s32 0, %v395
        %v397 = vrot.slane %v387, %v396
        %v398 = vlaneseq
        %v399 = vshrl.u32 %v398, 7
        %v400 = vsub.s32 0, %v399
        %v401 = vrot.slane %v388, %v400
        %v402 = vmul.f32 %v392, %v397
        %v403 = vmul.f32 %v392, %v401
        %405 = vset.pattern.permute.xlu0 0
        %406 = vperm.xlu0 %405, %v265
        %v407 = vpop.permute.xlu0 %406
        %v409 = vadd.f32 %v402, %v407
        %v410 = vadd.f32 %v403, %v407
        %411 = vset.pattern.permute.xlu0 1
        %412 = vperm.xlu0 %411, %v263
        %v413 = vpop.permute.xlu0 %412
        %v415 = vlaneseq
        %v416 = vshrl.u32 %v415, 7
        %v417 = vsub.s32 1, %v416
        %v418 = vrot.slane %v387, %v417
        %v419 = vlaneseq
        %v420 = vshrl.u32 %v419, 7
        %v421 = vsub.s32 1, %v420
        %v422 = vrot.slane %v388, %v421
        %v423 = vmul.f32 %v413, %v418
        %v424 = vmul.f32 %v413, %v422
        %v425 = vadd.f32 %v409, %v423
        %v426 = vadd.f32 %v410, %v424
        %427 = vset.pattern.permute.xlu0 2
        %428 = vperm.xlu0 %427, %v263
        %v429 = vpop.permute.xlu0 %428
        %v431 = vlaneseq
        %v432 = vshrl.u32 %v431, 7
        %v433 = vsub.s32 2, %v432
        %v434 = vrot.slane %v387, %v433
        %v435 = vlaneseq
        %v436 = vshrl.u32 %v435, 7
        %v437 = vsub.s32 2, %v436
        %v438 = vrot.slane %v388, %v437
        %v439 = vmul.f32 %v429, %v434
        %v440 = vmul.f32 %v429, %v438
        %v441 = vadd.f32 %v425, %v439
        %v442 = vadd.f32 %v426, %v440
        %443 = vset.pattern.permute.xlu0 3
        %444 = vperm.xlu0 %443, %v263
        %v445 = vpop.permute.xlu0 %444
        %v447 = vlaneseq
        %v448 = vshrl.u32 %v447, 7
        %v449 = vsub.s32 3, %v448
        %v450 = vrot.slane %v387, %v449
        %v451 = vlaneseq
        %v452 = vshrl.u32 %v451, 7
        %v453 = vsub.s32 3, %v452
        %v454 = vrot.slane %v388, %v453
        %v455 = vmul.f32 %v445, %v450
        %v456 = vmul.f32 %v445, %v454
        %v457 = vadd.f32 %v441, %v455
        %v458 = vadd.f32 %v442, %v456
        %v461 = vcombine.low %v457, %v458
        %463 = vst [vmem:[%s258] sm:$0xff] %v461
        %s464 = sand.u32 %s156, 1
        %s465 = scalar_lea.sflag [#allocation4], %s464
        %s466 = sand.u32 %s156, 1
        %s467 = smul.addr %s466, 8
        %s468 = scalar_lea.vmem [#allocation5], %s467
        // Predicated region
        $region45: #{tpu_custom_call.1} parent=39 // pred_check
          %p469 = pneg %p166
        $region46: #{tpu_custom_call.1} parent=39 // pred_check_branch
          %471 = sbr.rel (%p469) target = $region48
        $region47: #{tpu_custom_call.1} parent=39 // pred_region
          %s472 = smul.u32 2, %s27
          %s474 = ssub.s32 128, 128
          %475 = vsyncadd %s465, %s474
          %s476 = smul.addr %s26, 2
          %s477 = sadd.s32 %s472, %s476
          %s478 = smul.addr %s477, 64
          %s479 = scalar_lea.hbm %s5, %s478
          %s481 = sshll.u32 %s468, 4
          %s482 = int_to_ptr.vmem [resolvable:$true] %s481
          %484 = dma.vmem_to_hbm [thread:$0]  %s482, 128, %s479, %s465
        $region48: #{tpu_custom_call.1} parent=39 // pred_fallthru
          _
      $region40: #{tpu_custom_call.1} parent=5 // pred_fallthru
        _
      %p485 = scmp.le.s32.totalorder 2, %s17
      // Predicated region
      $region49: #{tpu_custom_call.1} parent=5 // pred_check
        %p486 = pneg %p485
      $region50: #{tpu_custom_call.1} parent=5 // pred_check_branch
        %488 = sbr.rel (%p486) target = $region52
      $region51: #{tpu_custom_call.1} parent=5 // pred_region
        %s489 = ssub.s32 %s17, 2
        // Predicated region
        $region53: #{tpu_custom_call.1} parent=51 // pred_check
          %p490 = pneg %p172
        $region54: #{tpu_custom_call.1} parent=51 // pred_check_branch
          %492 = sbr.rel (%p490) target = $region56
        $region55: #{tpu_custom_call.1} parent=51 // pred_region
          %s493 = sand.u32 %s157, 1
          %s494 = scalar_lea.sflag [#allocation4], %s493
          %s495 = sand.u32 %s157, 1
          %s496 = smul.addr %s495, 8
          %s497 = scalar_lea.vmem [#allocation5], %s496
          %498 = dma.done %s494, 128
        $region56: #{tpu_custom_call.1} parent=51 // pred_fallthru
          _
      $region52: #{tpu_custom_call.1} parent=5 // pred_fallthru
        _
    $region6: #{tpu_custom_call.1} parent=1 // loop_footer
      %s21 = sadd.s32 1, %s17
    $region7: #{tpu_custom_call.1} parent=1 // loop_footer_branch
      %16 = sbr.rel target = $region3
    $region8: #{tpu_custom_call.1} parent=1 // loop_exit
      _
    %499 = vsyncpa [#allocation3], 1
    %s500 = scalar_lea.sflag [#allocation3], 1
    %501 = vsyncpa %s500, 1
    %502 = vsyncpa [#allocation4], 1
    %s503 = scalar_lea.sflag [#allocation4], 1
    %504 = vsyncpa %s503, 1

</llo_original>
